<compile_context>
chip_gen: v5e
topology: v5e:2x2
jax: 0.10.0
libtpu: 0.0.40
codegen_flags: <defaults>
</compile_context>

<pallas_src>
import functools

import jax
import jax.numpy as jnp
import numpy as np
from jax import lax
from jax.experimental import pallas as pl
from jax.experimental.pallas import tpu as pltpu

TOL = 1e-18
LANE = 128


def _barnn_conv1d_kernel(x_ref, w_ref, w2_ref, alpha_ref, noise_ref, o_ref,
                         xs_ref):
    """One grid step processes NB batch samples.

    x_ref     : (NB, C_in, L_pad)        L_pad = L_out_pad + K - 1
    w_ref     : (C_out, K*C_in)          lane-dense packed W
    w2_ref    : (C_out, K*C_in)          lane-dense packed W**2
    alpha_ref : (NB, 1, 1)               f32 per-sample scalars
    noise_ref : (NB, C_out, L_out_pad)
    o_ref     : (NB, C_out, L_out_pad)
    xs_ref    : (K*C_in, NB*L_out_pad)   VMEM scratch (batched im2col slab)
    """
    NB, C_in, _ = x_ref.shape
    KC = w_ref.shape[1]
    K = KC // C_in
    L_out_pad = o_ref.shape[-1]

    # Build the batched im2col slab once; both matmuls reuse it:
    #   xs[k*C_in + c, b*L_out_pad + l] = x[b, c, l + k]
    for b in range(NB):                       # static unroll; NB, K are small
        for k in range(K):
            xs_ref[k * C_in:(k + 1) * C_in,
                   b * L_out_pad:(b + 1) * L_out_pad] = (
                       x_ref[b, :, k:k + L_out_pad])

    xs = xs_ref[...]
    # Single fused matmul per statistic for the whole batch block: output has
    # NB*L_out_pad lane-dense columns -> full-width MXU issue.
    mean = jnp.dot(w_ref[...], xs, preferred_element_type=jnp.float32)
    var = jnp.dot(w2_ref[...], xs * xs, preferred_element_type=jnp.float32)

    # Per-sample elementwise epilogue; keeps the (N, C_out, L_out_pad) HBM
    # layout so the wrapper needs no transpose, only a slice.
    for b in range(NB):
        cols = slice(b * L_out_pad, (b + 1) * L_out_pad)
        a = alpha_ref[b].astype(jnp.float32)          # (1, 1) -> broadcasts
        nz = noise_ref[b].astype(jnp.float32)         # (C_out, L_out_pad)
        o_ref[b] = (a * mean[:, cols]
                    + jnp.sqrt((a * a) * var[:, cols] + TOL) * nz
                    ).astype(o_ref.dtype)


@functools.partial(jax.jit, static_argnames=("block_n",))
def conv1d_barnn_forward(x, weight_ock, alpha, noise, *, block_n=8):
    """x: (N, C_in, L), weight_ock: (C_out, C_in, K), alpha: (N, 1, 1),
    noise: (N, C_out, L_out) -> (N, C_out, L_out)."""
    N, C_in, L = x.shape
    C_out, _, K = weight_ock.shape
    L_out = L - K + 1

    # Lane-dense output: pad L_out up to a multiple of 128 and pad x so every
    # shifted window of length L_out_pad stays in-bounds (padded lanes and
    # padded batch samples are sliced off below).
    L_out_pad = ((L_out + LANE - 1) // LANE) * LANE
    L_pad = L_out_pad + K - 1

    # Batch blocking: NB samples per grid step; pad N to a multiple of NB.
    NB = max(1, min(block_n, N))
    N_pad = ((N + NB - 1) // NB) * NB
    grid_n = N_pad // NB

    # Pad only when needed (skips the extra XLA pad copies on aligned shapes).
    if L_out_pad == L_out and N_pad == N:
        xp = x
        noise_p = noise.astype(x.dtype)
        alpha_p = alpha.reshape(N, 1, 1).astype(jnp.float32)
    else:
        xp = jnp.zeros((N_pad, C_in, L_pad), x.dtype).at[:N, :, :L].set(x)
        noise_p = jnp.zeros((N_pad, C_out, L_out_pad), x.dtype)
        noise_p = noise_p.at[:N, :, :L_out].set(noise.astype(x.dtype))
        alpha_p = jnp.ones((N_pad, 1, 1), jnp.float32)
        alpha_p = alpha_p.at[:N].set(
            alpha.reshape(N, 1, 1).astype(jnp.float32))

    # Pre-pack lane-dense weight slabs (grid-invariant), with layout
    #   w_slab[o, k*C_in + c] = W[o, c, k]   (matches the im2col slab above).
    w_slab = jnp.transpose(weight_ock, (0, 2, 1)).reshape(C_out, K * C_in)
    w_slab = w_slab.astype(x.dtype)
    w2_slab = w_slab * w_slab

    out_p = pl.pallas_call(
        _barnn_conv1d_kernel,
        out_shape=jax.ShapeDtypeStruct((N_pad, C_out, L_out_pad), x.dtype),
        grid_spec=pltpu.PrefetchScalarGridSpec(
            num_scalar_prefetch=0,
            grid=(grid_n,),
            in_specs=[
                pl.BlockSpec((NB, C_in, L_pad), lambda n: (n, 0, 0)),
                pl.BlockSpec((C_out, K * C_in), lambda n: (0, 0)),
                pl.BlockSpec((C_out, K * C_in), lambda n: (0, 0)),
                pl.BlockSpec((NB, 1, 1), lambda n: (n, 0, 0)),
                pl.BlockSpec((NB, C_out, L_out_pad), lambda n: (n, 0, 0)),
            ],
            out_specs=pl.BlockSpec((NB, C_out, L_out_pad),
                                   lambda n: (n, 0, 0)),
            scratch_shapes=[
                pltpu.VMEM((K * C_in, NB * L_out_pad), x.dtype)],
        ),
        compiler_params=pltpu.CompilerParams(
            dimension_semantics=("parallel",),
            vmem_limit_bytes=48 * 1024 * 1024,
        ),
    )(xp, w_slab, w2_slab, alpha_p, noise_p)

    return out_p[:N, :, :L_out]


def _reference_forward(x, weight_ock, alpha, noise):
    """Pure-JAX reference with the same semantics (NCL conv)."""
    dn = lax.conv_dimension_numbers(x.shape, weight_ock.shape,
                                    ("NCH", "OIH", "NCH"))
    conv = lambda a, w: lax.conv_general_dilated(
        a, w, window_strides=(1,), padding="VALID", dimension_numbers=dn)
    mean = alpha * conv(x, weight_ock)
    var = (alpha ** 2) * conv(x ** 2, weight_ock ** 2)
    return mean + jnp.sqrt(var + TOL) * noise


if __name__ == "__main__":
    # Small deterministic example: N=6, C_in=4, C_out=8, K=3, L=16.
    N, C_in, C_out, K, L = 6, 4, 8, 3, 16
    L_out = L - K + 1

    key = jax.random.PRNGKey(0)
    kx, kw, ka, kn = jax.random.split(key, 4)

    x = jax.random.normal(kx, (N, C_in, L), dtype=jnp.float32)
    # Deterministic "Conv1d" weight init (kaiming-uniform-like bound).
    bound = 1.0 / np.sqrt(C_in * K)
    weight_ock = jax.random.uniform(kw, (C_out, C_in, K), jnp.float32,
                                    minval=-bound, maxval=bound)
    alpha = jax.random.uniform(ka, (N, 1, 1), jnp.float32,
                               minval=0.5, maxval=1.5)
    # torch.randn_like(mean) equivalent: noise generated in JAX glue and
    # streamed into the kernel so the output can be checked exactly.
    noise = jax.random.normal(kn, (N, C_out, L_out), dtype=jnp.float32)

    # block_n=4 -> N padded 6->8, grid=(2,): exercises batch blocking, the
    # batch/L padding paths and a >=2-long parallel grid axis.
    out = conv1d_barnn_forward(x, weight_ock, alpha, noise, block_n=4)
    out = jax.block_until_ready(out)

    ref = jax.block_until_ready(_reference_forward(x, weight_ock, alpha, noise))
    np.testing.assert_allclose(np.asarray(out), np.asarray(ref),
                               rtol=1e-4, atol=1e-4)

    print("KERNEL_OK")
</pallas_src>

<mosaic_0001>
module attributes {stable_mosaic.version = 11 : i64} {
  func.func @_barnn_conv1d_kernel(%arg0: i32, %arg1: memref<4x4x130xf32, #tpu.memory_space<vmem>>, %arg2: memref<8x12xf32, #tpu.memory_space<vmem>>, %arg3: memref<8x12xf32, #tpu.memory_space<vmem>>, %arg4: memref<4x1x1xf32, #tpu.memory_space<vmem>>, %arg5: memref<4x8x128xf32, #tpu.memory_space<vmem>>, %arg6: memref<4x8x128xf32, #tpu.memory_space<vmem>>, %arg7: memref<12x512xf32, #tpu.memory_space<vmem>>) attributes {dimension_semantics = [#tpu.dimension_semantics<parallel>], iteration_bounds = array<i64: 2>, scalar_prefetch = 0 : i64, scratch_operands = 1 : i64, tpu.core_type = #tpu.core_type<tc>, window_params = [{transform_indices = @transform_0, window_bounds = array<i64: 4, 4, 130>}, {pipeline_mode = #tpu.pipeline_mode<synchronous>, transform_indices = @transform_1, window_bounds = array<i64: 8, 12>}, {pipeline_mode = #tpu.pipeline_mode<synchronous>, transform_indices = @transform_2, window_bounds = array<i64: 8, 12>}, {transform_indices = @transform_3, window_bounds = array<i64: 4, 1, 1>}, {transform_indices = @transform_4, window_bounds = array<i64: 4, 8, 128>}, {transform_indices = @transform_5, window_bounds = array<i64: 4, 8, 128>}]} {
    %c0 = arith.constant 0 : index
    %c0_0 = arith.constant 0 : index
    %c0_1 = arith.constant 0 : index
    %0 = vector.load %arg1[%c0, %c0_0, %c0_1] : memref<4x4x130xf32, #tpu.memory_space<vmem>>, vector<1x4x128xf32>
    %1 = vector.shape_cast %0 : vector<1x4x128xf32> to vector<4x128xf32>
    %c0_2 = arith.constant 0 : index
    %c0_3 = arith.constant 0 : index
    %2 = vector.load %arg7[%c0_2, %c0_3] : memref<12x512xf32, #tpu.memory_space<vmem>>, vector<4x128xf32>
    tpu.vector_store %arg7[%c0_2, %c0_3], %1 {strides = array<i32>} : memref<12x512xf32, #tpu.memory_space<vmem>>, vector<4x128xf32>,
    %c0_4 = arith.constant 0 : index
    %c0_5 = arith.constant 0 : index
    %c1 = arith.constant 1 : index
    %3 = vector.load %arg1[%c0_4, %c0_5, %c1] : memref<4x4x130xf32, #tpu.memory_space<vmem>>, vector<1x4x128xf32>
    %4 = vector.shape_cast %3 : vector<1x4x128xf32> to vector<4x128xf32>
    %c4 = arith.constant 4 : index
    %c0_6 = arith.constant 0 : index
    %5 = vector.load %arg7[%c4, %c0_6] : memref<12x512xf32, #tpu.memory_space<vmem>>, vector<4x128xf32>
    tpu.vector_store %arg7[%c4, %c0_6], %4 {strides = array<i32>} : memref<12x512xf32, #tpu.memory_space<vmem>>, vector<4x128xf32>,
    %c0_7 = arith.constant 0 : index
    %c0_8 = arith.constant 0 : index
    %c2 = arith.constant 2 : index
    %6 = vector.load %arg1[%c0_7, %c0_8, %c2] : memref<4x4x130xf32, #tpu.memory_space<vmem>>, vector<1x4x128xf32>
    %7 = vector.shape_cast %6 : vector<1x4x128xf32> to vector<4x128xf32>
    %c8 = arith.constant 8 : index
    %c0_9 = arith.constant 0 : index
    %8 = vector.load %arg7[%c8, %c0_9] : memref<12x512xf32, #tpu.memory_space<vmem>>, vector<4x128xf32>
    tpu.vector_store %arg7[%c8, %c0_9], %7 {strides = array<i32>} : memref<12x512xf32, #tpu.memory_space<vmem>>, vector<4x128xf32>,
    %c1_10 = arith.constant 1 : index
    %c0_11 = arith.constant 0 : index
    %c0_12 = arith.constant 0 : index
    %9 = vector.load %arg1[%c1_10, %c0_11, %c0_12] : memref<4x4x130xf32, #tpu.memory_space<vmem>>, vector<1x4x128xf32>
    %10 = vector.shape_cast %9 : vector<1x4x128xf32> to vector<4x128xf32>
    %c0_13 = arith.constant 0 : index
    %c128 = arith.constant 128 : index
    %11 = vector.load %arg7[%c0_13, %c128] : memref<12x512xf32, #tpu.memory_space<vmem>>, vector<4x128xf32>
    tpu.vector_store %arg7[%c0_13, %c128], %10 {strides = array<i32>} : memref<12x512xf32, #tpu.memory_space<vmem>>, vector<4x128xf32>,
    %c1_14 = arith.constant 1 : index
    %c0_15 = arith.constant 0 : index
    %c1_16 = arith.constant 1 : index
    %12 = vector.load %arg1[%c1_14, %c0_15, %c1_16] : memref<4x4x130xf32, #tpu.memory_space<vmem>>, vector<1x4x128xf32>
    %13 = vector.shape_cast %12 : vector<1x4x128xf32> to vector<4x128xf32>
    %c4_17 = arith.constant 4 : index
    %c128_18 = arith.constant 128 : index
    %14 = vector.load %arg7[%c4_17, %c128_18] : memref<12x512xf32, #tpu.memory_space<vmem>>, vector<4x128xf32>
    tpu.vector_store %arg7[%c4_17, %c128_18], %13 {strides = array<i32>} : memref<12x512xf32, #tpu.memory_space<vmem>>, vector<4x128xf32>,
    %c1_19 = arith.constant 1 : index
    %c0_20 = arith.constant 0 : index
    %c2_21 = arith.constant 2 : index
    %15 = vector.load %arg1[%c1_19, %c0_20, %c2_21] : memref<4x4x130xf32, #tpu.memory_space<vmem>>, vector<1x4x128xf32>
    %16 = vector.shape_cast %15 : vector<1x4x128xf32> to vector<4x128xf32>
    %c8_22 = arith.constant 8 : index
    %c128_23 = arith.constant 128 : index
    %17 = vector.load %arg7[%c8_22, %c128_23] : memref<12x512xf32, #tpu.memory_space<vmem>>, vector<4x128xf32>
    tpu.vector_store %arg7[%c8_22, %c128_23], %16 {strides = array<i32>} : memref<12x512xf32, #tpu.memory_space<vmem>>, vector<4x128xf32>,
    %c2_24 = arith.constant 2 : index
    %c0_25 = arith.constant 0 : index
    %c0_26 = arith.constant 0 : index
    %18 = vector.load %arg1[%c2_24, %c0_25, %c0_26] : memref<4x4x130xf32, #tpu.memory_space<vmem>>, vector<1x4x128xf32>
    %19 = vector.shape_cast %18 : vector<1x4x128xf32> to vector<4x128xf32>
    %c0_27 = arith.constant 0 : index
    %c256 = arith.constant 256 : index
    %20 = vector.load %arg7[%c0_27, %c256] : memref<12x512xf32, #tpu.memory_space<vmem>>, vector<4x128xf32>
    tpu.vector_store %arg7[%c0_27, %c256], %19 {strides = array<i32>} : memref<12x512xf32, #tpu.memory_space<vmem>>, vector<4x128xf32>,
    %c2_28 = arith.constant 2 : index
    %c0_29 = arith.constant 0 : index
    %c1_30 = arith.constant 1 : index
    %21 = vector.load %arg1[%c2_28, %c0_29, %c1_30] : memref<4x4x130xf32, #tpu.memory_space<vmem>>, vector<1x4x128xf32>
    %22 = vector.shape_cast %21 : vector<1x4x128xf32> to vector<4x128xf32>
    %c4_31 = arith.constant 4 : index
    %c256_32 = arith.constant 256 : index
    %23 = vector.load %arg7[%c4_31, %c256_32] : memref<12x512xf32, #tpu.memory_space<vmem>>, vector<4x128xf32>
    tpu.vector_store %arg7[%c4_31, %c256_32], %22 {strides = array<i32>} : memref<12x512xf32, #tpu.memory_space<vmem>>, vector<4x128xf32>,
    %c2_33 = arith.constant 2 : index
    %c0_34 = arith.constant 0 : index
    %c2_35 = arith.constant 2 : index
    %24 = vector.load %arg1[%c2_33, %c0_34, %c2_35] : memref<4x4x130xf32, #tpu.memory_space<vmem>>, vector<1x4x128xf32>
    %25 = vector.shape_cast %24 : vector<1x4x128xf32> to vector<4x128xf32>
    %c8_36 = arith.constant 8 : index
    %c256_37 = arith.constant 256 : index
    %26 = vector.load %arg7[%c8_36, %c256_37] : memref<12x512xf32, #tpu.memory_space<vmem>>, vector<4x128xf32>
    tpu.vector_store %arg7[%c8_36, %c256_37], %25 {strides = array<i32>} : memref<12x512xf32, #tpu.memory_space<vmem>>, vector<4x128xf32>,
    %c3 = arith.constant 3 : index
    %c0_38 = arith.constant 0 : index
    %c0_39 = arith.constant 0 : index
    %27 = vector.load %arg1[%c3, %c0_38, %c0_39] : memref<4x4x130xf32, #tpu.memory_space<vmem>>, vector<1x4x128xf32>
    %28 = vector.shape_cast %27 : vector<1x4x128xf32> to vector<4x128xf32>
    %c0_40 = arith.constant 0 : index
    %c384 = arith.constant 384 : index
    %29 = vector.load %arg7[%c0_40, %c384] : memref<12x512xf32, #tpu.memory_space<vmem>>, vector<4x128xf32>
    tpu.vector_store %arg7[%c0_40, %c384], %28 {strides = array<i32>} : memref<12x512xf32, #tpu.memory_space<vmem>>, vector<4x128xf32>,
    %c3_41 = arith.constant 3 : index
    %c0_42 = arith.constant 0 : index
    %c1_43 = arith.constant 1 : index
    %30 = vector.load %arg1[%c3_41, %c0_42, %c1_43] : memref<4x4x130xf32, #tpu.memory_space<vmem>>, vector<1x4x128xf32>
    %31 = vector.shape_cast %30 : vector<1x4x128xf32> to vector<4x128xf32>
    %c4_44 = arith.constant 4 : index
    %c384_45 = arith.constant 384 : index
    %32 = vector.load %arg7[%c4_44, %c384_45] : memref<12x512xf32, #tpu.memory_space<vmem>>, vector<4x128xf32>
    tpu.vector_store %arg7[%c4_44, %c384_45], %31 {strides = array<i32>} : memref<12x512xf32, #tpu.memory_space<vmem>>, vector<4x128xf32>,
    %c3_46 = arith.constant 3 : index
    %c0_47 = arith.constant 0 : index
    %c2_48 = arith.constant 2 : index
    %33 = vector.load %arg1[%c3_46, %c0_47, %c2_48] : memref<4x4x130xf32, #tpu.memory_space<vmem>>, vector<1x4x128xf32>
    %34 = vector.shape_cast %33 : vector<1x4x128xf32> to vector<4x128xf32>
    %c8_49 = arith.constant 8 : index
    %c384_50 = arith.constant 384 : index
    %35 = vector.load %arg7[%c8_49, %c384_50] : memref<12x512xf32, #tpu.memory_space<vmem>>, vector<4x128xf32>
    tpu.vector_store %arg7[%c8_49, %c384_50], %34 {strides = array<i32>} : memref<12x512xf32, #tpu.memory_space<vmem>>, vector<4x128xf32>,
    %c0_51 = arith.constant 0 : index
    %c0_52 = arith.constant 0 : index
    %36 = vector.load %arg7[%c0_51, %c0_52] : memref<12x512xf32, #tpu.memory_space<vmem>>, vector<12x512xf32>
    %c0_53 = arith.constant 0 : index
    %c0_54 = arith.constant 0 : index
    %37 = vector.load %arg2[%c0_53, %c0_54] : memref<8x12xf32, #tpu.memory_space<vmem>>, vector<8x12xf32>
    %cst = arith.constant dense<0.000000e+00> : vector<8x512xf32>
    %38 = tpu.matmul %37, %36, %cst {dimension_numbers = #tpu.dot_dimension_numbers<[1], [0], [0], [1], [0, 0, 1, 1], [], []>} : vector<8x12xf32>, vector<12x512xf32>, vector<8x512xf32> -> vector<8x512xf32>
    %c0_55 = arith.constant 0 : index
    %c0_56 = arith.constant 0 : index
    %39 = vector.load %arg3[%c0_55, %c0_56] : memref<8x12xf32, #tpu.memory_space<vmem>>, vector<8x12xf32>
    %40 = arith.mulf %36, %36 : vector<12x512xf32>
    %cst_57 = arith.constant dense<0.000000e+00> : vector<8x512xf32>
    %41 = tpu.matmul %39, %40, %cst_57 {dimension_numbers = #tpu.dot_dimension_numbers<[1], [0], [0], [1], [0, 0, 1, 1], [], []>} : vector<8x12xf32>, vector<12x512xf32>, vector<8x512xf32> -> vector<8x512xf32>
    %c0_58 = arith.constant 0 : index
    %c0_59 = arith.constant 0 : index
    %c0_60 = arith.constant 0 : index
    %42 = vector.load %arg4[%c0_58, %c0_59, %c0_60] : memref<4x1x1xf32, #tpu.memory_space<vmem>>, vector<1x1x1xf32>
    %43 = vector.shape_cast %42 : vector<1x1x1xf32> to vector<1x1xf32>
    %c0_61 = arith.constant 0 : index
    %c0_62 = arith.constant 0 : index
    %c0_63 = arith.constant 0 : index
    %44 = vector.load %arg5[%c0_61, %c0_62, %c0_63] : memref<4x8x128xf32, #tpu.memory_space<vmem>>, vector<1x8x128xf32>
    %45 = vector.shape_cast %44 : vector<1x8x128xf32> to vector<8x128xf32>
    %46 = vector.extract_strided_slice %38 {offsets = [0, 0], sizes = [8, 128], strides = [1, 1]} : vector<8x512xf32> to vector<8x128xf32>
    %47 = vector.broadcast %43 : vector<1x1xf32> to vector<8x128xf32>
    %48 = arith.mulf %47, %46 : vector<8x128xf32>
    %49 = arith.mulf %43, %43 : vector<1x1xf32>
    %50 = vector.extract_strided_slice %41 {offsets = [0, 0], sizes = [8, 128], strides = [1, 1]} : vector<8x512xf32> to vector<8x128xf32>
    %51 = vector.broadcast %49 : vector<1x1xf32> to vector<8x128xf32>
    %52 = arith.mulf %51, %50 : vector<8x128xf32>
    %cst_64 = arith.constant 1.000000e-18 : f32
    %53 = vector.broadcast %cst_64 : f32 to vector<8x128xf32>
    %54 = arith.addf %52, %53 : vector<8x128xf32>
    %55 = math.sqrt %54 : vector<8x128xf32>
    %56 = arith.mulf %55, %45 : vector<8x128xf32>
    %57 = arith.addf %48, %56 : vector<8x128xf32>
    %c0_65 = arith.constant 0 : index
    %c0_66 = arith.constant 0 : index
    %c0_67 = arith.constant 0 : index
    %58 = vector.load %arg6[%c0_65, %c0_66, %c0_67] : memref<4x8x128xf32, #tpu.memory_space<vmem>>, vector<1x8x128xf32>
    %59 = vector.shape_cast %58 : vector<1x8x128xf32> to vector<8x128xf32>
    %60 = vector.shape_cast %57 : vector<8x128xf32> to vector<1x8x128xf32>
    tpu.vector_store %arg6[%c0_65, %c0_66, %c0_67], %60 {strides = array<i32>} : memref<4x8x128xf32, #tpu.memory_space<vmem>>, vector<1x8x128xf32>,
    %c1_68 = arith.constant 1 : index
    %c0_69 = arith.constant 0 : index
    %c0_70 = arith.constant 0 : index
    %61 = vector.load %arg4[%c1_68, %c0_69, %c0_70] : memref<4x1x1xf32, #tpu.memory_space<vmem>>, vector<1x1x1xf32>
    %62 = vector.shape_cast %61 : vector<1x1x1xf32> to vector<1x1xf32>
    %c1_71 = arith.constant 1 : index
    %c0_72 = arith.constant 0 : index
    %c0_73 = arith.constant 0 : index
    %63 = vector.load %arg5[%c1_71, %c0_72, %c0_73] : memref<4x8x128xf32, #tpu.memory_space<vmem>>, vector<1x8x128xf32>
    %64 = vector.shape_cast %63 : vector<1x8x128xf32> to vector<8x128xf32>
    %65 = vector.extract_strided_slice %38 {offsets = [0, 128], sizes = [8, 128], strides = [1, 1]} : vector<8x512xf32> to vector<8x128xf32>
    %66 = vector.broadcast %62 : vector<1x1xf32> to vector<8x128xf32>
    %67 = arith.mulf %66, %65 : vector<8x128xf32>
    %68 = arith.mulf %62, %62 : vector<1x1xf32>
    %69 = vector.extract_strided_slice %41 {offsets = [0, 128], sizes = [8, 128], strides = [1, 1]} : vector<8x512xf32> to vector<8x128xf32>
    %70 = vector.broadcast %68 : vector<1x1xf32> to vector<8x128xf32>
    %71 = arith.mulf %70, %69 : vector<8x128xf32>
    %cst_74 = arith.constant 1.000000e-18 : f32
    %72 = vector.broadcast %cst_74 : f32 to vector<8x128xf32>
    %73 = arith.addf %71, %72 : vector<8x128xf32>
    %74 = math.sqrt %73 : vector<8x128xf32>
    %75 = arith.mulf %74, %64 : vector<8x128xf32>
    %76 = arith.addf %67, %75 : vector<8x128xf32>
    %c1_75 = arith.constant 1 : index
    %c0_76 = arith.constant 0 : index
    %c0_77 = arith.constant 0 : index
    %77 = vector.load %arg6[%c1_75, %c0_76, %c0_77] : memref<4x8x128xf32, #tpu.memory_space<vmem>>, vector<1x8x128xf32>
    %78 = vector.shape_cast %77 : vector<1x8x128xf32> to vector<8x128xf32>
    %79 = vector.shape_cast %76 : vector<8x128xf32> to vector<1x8x128xf32>
    tpu.vector_store %arg6[%c1_75, %c0_76, %c0_77], %79 {strides = array<i32>} : memref<4x8x128xf32, #tpu.memory_space<vmem>>, vector<1x8x128xf32>,
    %c2_78 = arith.constant 2 : index
    %c0_79 = arith.constant 0 : index
    %c0_80 = arith.constant 0 : index
    %80 = vector.load %arg4[%c2_78, %c0_79, %c0_80] : memref<4x1x1xf32, #tpu.memory_space<vmem>>, vector<1x1x1xf32>
    %81 = vector.shape_cast %80 : vector<1x1x1xf32> to vector<1x1xf32>
    %c2_81 = arith.constant 2 : index
    %c0_82 = arith.constant 0 : index
    %c0_83 = arith.constant 0 : index
    %82 = vector.load %arg5[%c2_81, %c0_82, %c0_83] : memref<4x8x128xf32, #tpu.memory_space<vmem>>, vector<1x8x128xf32>
    %83 = vector.shape_cast %82 : vector<1x8x128xf32> to vector<8x128xf32>
    %84 = vector.extract_strided_slice %38 {offsets = [0, 256], sizes = [8, 128], strides = [1, 1]} : vector<8x512xf32> to vector<8x128xf32>
    %85 = vector.broadcast %81 : vector<1x1xf32> to vector<8x128xf32>
    %86 = arith.mulf %85, %84 : vector<8x128xf32>
    %87 = arith.mulf %81, %81 : vector<1x1xf32>
    %88 = vector.extract_strided_slice %41 {offsets = [0, 256], sizes = [8, 128], strides = [1, 1]} : vector<8x512xf32> to vector<8x128xf32>
    %89 = vector.broadcast %87 : vector<1x1xf32> to vector<8x128xf32>
    %90 = arith.mulf %89, %88 : vector<8x128xf32>
    %cst_84 = arith.constant 1.000000e-18 : f32
    %91 = vector.broadcast %cst_84 : f32 to vector<8x128xf32>
    %92 = arith.addf %90, %91 : vector<8x128xf32>
    %93 = math.sqrt %92 : vector<8x128xf32>
    %94 = arith.mulf %93, %83 : vector<8x128xf32>
    %95 = arith.addf %86, %94 : vector<8x128xf32>
    %c2_85 = arith.constant 2 : index
    %c0_86 = arith.constant 0 : index
    %c0_87 = arith.constant 0 : index
    %96 = vector.load %arg6[%c2_85, %c0_86, %c0_87] : memref<4x8x128xf32, #tpu.memory_space<vmem>>, vector<1x8x128xf32>
    %97 = vector.shape_cast %96 : vector<1x8x128xf32> to vector<8x128xf32>
    %98 = vector.shape_cast %95 : vector<8x128xf32> to vector<1x8x128xf32>
    tpu.vector_store %arg6[%c2_85, %c0_86, %c0_87], %98 {strides = array<i32>} : memref<4x8x128xf32, #tpu.memory_space<vmem>>, vector<1x8x128xf32>,
    %c3_88 = arith.constant 3 : index
    %c0_89 = arith.constant 0 : index
    %c0_90 = arith.constant 0 : index
    %99 = vector.load %arg4[%c3_88, %c0_89, %c0_90] : memref<4x1x1xf32, #tpu.memory_space<vmem>>, vector<1x1x1xf32>
    %100 = vector.shape_cast %99 : vector<1x1x1xf32> to vector<1x1xf32>
    %c3_91 = arith.constant 3 : index
    %c0_92 = arith.constant 0 : index
    %c0_93 = arith.constant 0 : index
    %101 = vector.load %arg5[%c3_91, %c0_92, %c0_93] : memref<4x8x128xf32, #tpu.memory_space<vmem>>, vector<1x8x128xf32>
    %102 = vector.shape_cast %101 : vector<1x8x128xf32> to vector<8x128xf32>
    %103 = vector.extract_strided_slice %38 {offsets = [0, 384], sizes = [8, 128], strides = [1, 1]} : vector<8x512xf32> to vector<8x128xf32>
    %104 = vector.broadcast %100 : vector<1x1xf32> to vector<8x128xf32>
    %105 = arith.mulf %104, %103 : vector<8x128xf32>
    %106 = arith.mulf %100, %100 : vector<1x1xf32>
    %107 = vector.extract_strided_slice %41 {offsets = [0, 384], sizes = [8, 128], strides = [1, 1]} : vector<8x512xf32> to vector<8x128xf32>
    %108 = vector.broadcast %106 : vector<1x1xf32> to vector<8x128xf32>
    %109 = arith.mulf %108, %107 : vector<8x128xf32>
    %cst_94 = arith.constant 1.000000e-18 : f32
    %110 = vector.broadcast %cst_94 : f32 to vector<8x128xf32>
    %111 = arith.addf %109, %110 : vector<8x128xf32>
    %112 = math.sqrt %111 : vector<8x128xf32>
    %113 = arith.mulf %112, %102 : vector<8x128xf32>
    %114 = arith.addf %105, %113 : vector<8x128xf32>
    %c3_95 = arith.constant 3 : index
    %c0_96 = arith.constant 0 : index
    %c0_97 = arith.constant 0 : index
    %115 = vector.load %arg6[%c3_95, %c0_96, %c0_97] : memref<4x8x128xf32, #tpu.memory_space<vmem>>, vector<1x8x128xf32>
    %116 = vector.shape_cast %115 : vector<1x8x128xf32> to vector<8x128xf32>
    %117 = vector.shape_cast %114 : vector<8x128xf32> to vector<1x8x128xf32>
    tpu.vector_store %arg6[%c3_95, %c0_96, %c0_97], %117 {strides = array<i32>} : memref<4x8x128xf32, #tpu.memory_space<vmem>>, vector<1x8x128xf32>,
    return
  }
  func.func @transform_0(%arg0: i32) -> (i32, i32, i32) {
    %c0_i32 = arith.constant 0 : i32
    %c0_i32_0 = arith.constant 0 : i32
    %c0_i32_1 = arith.constant 0 : i32
    return %arg0, %c0_i32, %c0_i32_0 : i32, i32, i32
  }
  func.func @transform_1(%arg0: i32) -> (i32, i32) {
    %c0_i32 = arith.constant 0 : i32
    %c0_i32_0 = arith.constant 0 : i32
    %c0_i32_1 = arith.constant 0 : i32
    return %c0_i32, %c0_i32_0 : i32, i32
  }
  func.func @transform_2(%arg0: i32) -> (i32, i32) {
    %c0_i32 = arith.constant 0 : i32
    %c0_i32_0 = arith.constant 0 : i32
    %c0_i32_1 = arith.constant 0 : i32
    return %c0_i32, %c0_i32_0 : i32, i32
  }
  func.func @transform_3(%arg0: i32) -> (i32, i32, i32) {
    %c0_i32 = arith.constant 0 : i32
    %c0_i32_0 = arith.constant 0 : i32
    %c0_i32_1 = arith.constant 0 : i32
    return %arg0, %c0_i32, %c0_i32_0 : i32, i32, i32
  }
  func.func @transform_4(%arg0: i32) -> (i32, i32, i32) {
    %c0_i32 = arith.constant 0 : i32
    %c0_i32_0 = arith.constant 0 : i32
    %c0_i32_1 = arith.constant 0 : i32
    return %arg0, %c0_i32, %c0_i32_0 : i32, i32, i32
  }
  func.func @transform_5(%arg0: i32) -> (i32, i32, i32) {
    %c0_i32 = arith.constant 0 : i32
    %c0_i32_0 = arith.constant 0 : i32
    %c0_i32_1 = arith.constant 0 : i32
    return %arg0, %c0_i32, %c0_i32_0 : i32, i32, i32
  }
}

</mosaic_0001>

<llo_original>
// kernel: mul.1
$region0: #{mul.1}
  #allocation0 [shape = 's32[1]{0}', space=sflag, size = 0x4, scoped, tag = 'scoped memory for mul.1']
  %s0 = inlined_call_operand.vmem [shape: f32[8,12], index: 0, kind: input, shape index: {}, may-alias: {0,1}]
  %s1 = inlined_call_operand.vmem [shape: f32[8,12], index: 1, kind: input, shape index: {}, may-alias: {0,1}]
  %s2 = inlined_call_operand.vmem [shape: f32[8,12], index: 2, kind: output, shape index: {}]
  %v3 = vld [vmem:[%s0] sm:$0xff]
  %v4 = vld [vmem:[%s1] sm:$0xff]
  %5 = xla_tuple %v3, %v4
  %6 = xla_tuple %5
  %v7 = vmul.f32 %v3, %v4
  %8 = xla_tuple %v7
  %9 = vst [vmem:[%s2] sm:$0xff] %v7

// kernel: conv1d_barnn_forward.1
$region0: #{conv1d_barnn_forward.1}
  #allocation0 [shape = 'u32[]', space=smem, size = 0x4, offset = 0x4, fixed_abs, tag = 'smem constant byte address 0x4 - core index']
  #allocation1 [shape = 'u32[72,128]{1,0:T(1,128)}', space=vmem, size = 0x9000, scoped, tag = 'internal scratch']
  #allocation2 [shape = 'f32[12,512]{1,0:T(8,128)}', space=vmem, size = 0x8000, scoped, tag = 'scratch operand']
  %s0 = inlined_call_operand.vmem [shape: f32[8,4,130], index: 0, kind: input, shape index: {}]
  %s1 = inlined_call_operand.vmem [shape: f32[8,12], index: 1, kind: input, shape index: {}]
  %s2 = inlined_call_operand.vmem [shape: f32[8,12], index: 2, kind: input, shape index: {}]
  %s3 = inlined_call_operand.vmem [shape: f32[8,1,1], index: 3, kind: input, shape index: {}]
  %s4 = inlined_call_operand.vmem [shape: f32[8,8,128], index: 4, kind: input, shape index: {}]
  %s5 = inlined_call_operand.vmem [shape: f32[8,8,128], index: 5, kind: output, shape index: {}]
  %s6 = sld [smem:[#allocation0]]
  $region53: #{conv1d_barnn_forward.1} parent=0
    _
  %s8 = ssub.s32 1, %s6
  %s9 = scalar_select 0, %s8, %s6
  loop: start=0, step=1, limit=4
  $region2: #{conv1d_barnn_forward.1} parent=0 // loop_pre_header
    _
  $region3: #{conv1d_barnn_forward.1} parent=0 // loop_header
    %s11 = sphi 0, %s15
    %p12 = scmp.ge.s32.totalorder %s11, 4
    %s21 = sphi 0, %s23
    %s24 = sphi 0, %s21
    %s25 = sphi 0, %s24
    %s41 = sphi 0, %s25
    %s45 = sphi 0, %s45
    %s47 = sphi 0, %s45
    %s48 = sphi 0, %s47
    %s62 = sphi 0, %s48
    %s66 = sphi 0, %s66
    %s68 = sphi 0, %s66
    %s69 = sphi 0, %s68
    %s83 = sphi 0, %s69
    %s89 = sphi 0, %s91
    %s92 = sphi 0, %s89
    %s93 = sphi 0, %s92
    %s109 = sphi 0, %s93
    %s115 = sphi 0, %s117
    %s118 = sphi 0, %s115
    %s119 = sphi 0, %s118
    %s135 = sphi 0, %s119
    %s141 = sphi 0, %s143
    %s144 = sphi 0, %s141
    %s145 = sphi 0, %s144
    %s161 = sphi 0, %s145
  $region4: #{conv1d_barnn_forward.1} parent=0 // loop_header_branch
    %14 = sbr.rel (%p12) target = $region8
  $region5: #{conv1d_barnn_forward.1} parent=0 // loop_body
    %s16 = ssub.s32 %s11, 1
    %s17 = ssub.s32 %s11, 2
    %s18 = sadd.s32 %s11, 1
    %s19 = ssub.s32 %s11, %s18
    %p20 = scmp.eq.s32.totalorder %s19, 0
    %s22 = sadd.s32 %s21, 1
    %s23 = scalar_select %p20, %s21, %s22
    %p26 = pneg %p20
    %p27 = scmp.eq.s32.totalorder %s11, 1
    %p28 = por %p26, %p27
    %p29 = scmp.ne.s32.totalorder %s21, %s24
    %p30 = scmp.eq.s32.totalorder %s11, 0
    %p31 = por %p29, %p30
    %p32 = scmp.ne.s32.totalorder %s21, %s24
    %p33 = scmp.eq.s32.totalorder %s16, 1
    %p34 = por %p32, %p33
    %p35 = scmp.ne.s32.totalorder %s24, %s25
    %p36 = scmp.eq.s32.totalorder %s16, 0
    %p37 = por %p35, %p36
    %p38 = scmp.ne.s32.totalorder %s24, %s25
    %p39 = scmp.eq.s32.totalorder %s17, 1
    %p40 = por %p38, %p39
    %p42 = scmp.ne.s32.totalorder %s25, %s41
    %p43 = scmp.eq.s32.totalorder %s17, 0
    %p44 = por %p42, %p43
    %s46 = sadd.s32 %s45, 1
    %p49 = scmp.eq.s32.totalorder %s11, 1
    %p50 = scmp.ne.s32.totalorder %s45, %s47
    %p51 = scmp.eq.s32.totalorder %s11, 0
    %p52 = por %p50, %p51
    %p53 = scmp.ne.s32.totalorder %s45, %s47
    %p54 = scmp.eq.s32.totalorder %s16, 1
    %p55 = por %p53, %p54
    %p56 = scmp.ne.s32.totalorder %s47, %s48
    %p57 = scmp.eq.s32.totalorder %s16, 0
    %p58 = por %p56, %p57
    %p59 = scmp.ne.s32.totalorder %s47, %s48
    %p60 = scmp.eq.s32.totalorder %s17, 1
    %p61 = por %p59, %p60
    %p63 = scmp.ne.s32.totalorder %s48, %s62
    %p64 = scmp.eq.s32.totalorder %s17, 0
    %p65 = por %p63, %p64
    %s67 = sadd.s32 %s66, 1
    %p70 = scmp.eq.s32.totalorder %s11, 1
    %p71 = scmp.ne.s32.totalorder %s66, %s68
    %p72 = scmp.eq.s32.totalorder %s11, 0
    %p73 = por %p71, %p72
    %p74 = scmp.ne.s32.totalorder %s66, %s68
    %p75 = scmp.eq.s32.totalorder %s16, 1
    %p76 = por %p74, %p75
    %p77 = scmp.ne.s32.totalorder %s68, %s69
    %p78 = scmp.eq.s32.totalorder %s16, 0
    %p79 = por %p77, %p78
    %p80 = scmp.ne.s32.totalorder %s68, %s69
    %p81 = scmp.eq.s32.totalorder %s17, 1
    %p82 = por %p80, %p81
    %p84 = scmp.ne.s32.totalorder %s69, %s83
    %p85 = scmp.eq.s32.totalorder %s17, 0
    %p86 = por %p84, %p85
    %s87 = ssub.s32 %s11, %s18
    %p88 = scmp.eq.s32.totalorder %s87, 0
    %s90 = sadd.s32 %s89, 1
    %s91 = scalar_select %p88, %s89, %s90
    %p94 = pneg %p88
    %p95 = scmp.eq.s32.totalorder %s11, 1
    %p96 = por %p94, %p95
    %p97 = scmp.ne.s32.totalorder %s89, %s92
    %p98 = scmp.eq.s32.totalorder %s11, 0
    %p99 = por %p97, %p98
    %p100 = scmp.ne.s32.totalorder %s89, %s92
    %p101 = scmp.eq.s32.totalorder %s16, 1
    %p102 = por %p100, %p101
    %p103 = scmp.ne.s32.totalorder %s92, %s93
    %p104 = scmp.eq.s32.totalorder %s16, 0
    %p105 = por %p103, %p104
    %p106 = scmp.ne.s32.totalorder %s92, %s93
    %p107 = scmp.eq.s32.totalorder %s17, 1
    %p108 = por %p106, %p107
    %p110 = scmp.ne.s32.totalorder %s93, %s109
    %p111 = scmp.eq.s32.totalorder %s17, 0
    %p112 = por %p110, %p111
    %s113 = ssub.s32 %s11, %s18
    %p114 = scmp.eq.s32.totalorder %s113, 0
    %s116 = sadd.s32 %s115, 1
    %s117 = scalar_select %p114, %s115, %s116
    %p120 = pneg %p114
    %p121 = scmp.eq.s32.totalorder %s11, 1
    %p122 = por %p120, %p121
    %p123 = scmp.ne.s32.totalorder %s115, %s118
    %p124 = scmp.eq.s32.totalorder %s11, 0
    %p125 = por %p123, %p124
    %p126 = scmp.ne.s32.totalorder %s115, %s118
    %p127 = scmp.eq.s32.totalorder %s16, 1
    %p128 = por %p126, %p127
    %p129 = scmp.ne.s32.totalorder %s118, %s119
    %p130 = scmp.eq.s32.totalorder %s16, 0
    %p131 = por %p129, %p130
    %p132 = scmp.ne.s32.totalorder %s118, %s119
    %p133 = scmp.eq.s32.totalorder %s17, 1
    %p134 = por %p132, %p133
    %p136 = scmp.ne.s32.totalorder %s119, %s135
    %p137 = scmp.eq.s32.totalorder %s17, 0
    %p138 = por %p136, %p137
    %s139 = ssub.s32 %s11, %s18
    %p140 = scmp.eq.s32.totalorder %s139, 0
    %s142 = sadd.s32 %s141, 1
    %s143 = scalar_select %p140, %s141, %s142
    %p146 = pneg %p140
    %p147 = scmp.eq.s32.totalorder %s11, 1
    %p148 = por %p146, %p147
    %p149 = scmp.ne.s32.totalorder %s141, %s144
    %p150 = scmp.eq.s32.totalorder %s11, 0
    %p151 = por %p149, %p150
    %p152 = scmp.ne.s32.totalorder %s141, %s144
    %p153 = scmp.eq.s32.totalorder %s16, 1
    %p154 = por %p152, %p153
    %p155 = scmp.ne.s32.totalorder %s144, %s145
    %p156 = scmp.eq.s32.totalorder %s16, 0
    %p157 = por %p155, %p156
    %p158 = scmp.ne.s32.totalorder %s144, %s145
    %p159 = scmp.eq.s32.totalorder %s17, 1
    %p160 = por %p158, %p159
    %p162 = scmp.ne.s32.totalorder %s145, %s161
    %p163 = scmp.eq.s32.totalorder %s17, 0
    %p164 = por %p162, %p163
    %p165 = scmp.le.s32.totalorder 1, %s11
    %p166 = scmp.lt.s32.totalorder %s11, 3
    %p167 = pnand %p165, %p166
    %p168 = pneg %p167
    // Predicated region
    $region9: #{conv1d_barnn_forward.1} parent=5 // pred_check
      _
    $region10: #{conv1d_barnn_forward.1} parent=5 // pred_check_branch
      %170 = sbr.rel (%p167) target = $region12
    $region11: #{conv1d_barnn_forward.1} parent=5 // pred_region
      %s171 = ssub.s32 %s11, 1
      // Predicated region
      $region13: #{conv1d_barnn_forward.1} parent=11 // pred_check
        %p172 = pneg %p58
      $region14: #{conv1d_barnn_forward.1} parent=11 // pred_check_branch
        %174 = sbr.rel (%p172) target = $region16
      $region15: #{conv1d_barnn_forward.1} parent=11 // pred_region
        _
      $region16: #{conv1d_barnn_forward.1} parent=11 // pred_fallthru
        _
      // Predicated region
      $region17: #{conv1d_barnn_forward.1} parent=11 // pred_check
        %p175 = pneg %p79
      $region18: #{conv1d_barnn_forward.1} parent=11 // pred_check_branch
        %177 = sbr.rel (%p175) target = $region20
      $region19: #{conv1d_barnn_forward.1} parent=11 // pred_region
        _
      $region20: #{conv1d_barnn_forward.1} parent=11 // pred_fallthru
        _
    $region12: #{conv1d_barnn_forward.1} parent=5 // pred_fallthru
      _
    %p178 = scmp.lt.s32.totalorder %s11, 2
    // Predicated region
    $region21: #{conv1d_barnn_forward.1} parent=5 // pred_check
      %p179 = pneg %p178
    $region22: #{conv1d_barnn_forward.1} parent=5 // pred_check_branch
      %181 = sbr.rel (%p179) target = $region24
    $region23: #{conv1d_barnn_forward.1} parent=5 // pred_region
      // Predicated region
      $region25: #{conv1d_barnn_forward.1} parent=23 // pred_check
        %p182 = pneg %p31
      $region26: #{conv1d_barnn_forward.1} parent=23 // pred_check_branch
        %184 = sbr.rel (%p182) target = $region28
      $region27: #{conv1d_barnn_forward.1} parent=23 // pred_region
        %s185 = smul.u32 4, %s11
        %p186 = scmp.lt.s32.totalorder %s185, 7
        %s187 = scalar_select %p186, %s185, 7
        %s188 = smul.addr %s187, 2
        %s189 = smul.addr %s188, 4
        %s190 = scalar_lea.vmem %s0, %s189
        %s191 = smul.u32 4, %s11
      $region28: #{conv1d_barnn_forward.1} parent=23 // pred_fallthru
        _
      // Predicated region
      $region29: #{conv1d_barnn_forward.1} parent=23 // pred_check
        %p192 = pneg %p99
      $region30: #{conv1d_barnn_forward.1} parent=23 // pred_check_branch
        %194 = sbr.rel (%p192) target = $region32
      $region31: #{conv1d_barnn_forward.1} parent=23 // pred_region
        %s195 = smul.u32 4, %s11
        %p196 = scmp.lt.s32.totalorder %s195, 7
        %s197 = scalar_select %p196, %s195, 7
        %s198 = scalar_lea.vmem %s3, %s197
        %s199 = smul.u32 4, %s11
      $region32: #{conv1d_barnn_forward.1} parent=23 // pred_fallthru
        _
      // Predicated region
      $region33: #{conv1d_barnn_forward.1} parent=23 // pred_check
        %p200 = pneg %p125
      $region34: #{conv1d_barnn_forward.1} parent=23 // pred_check_branch
        %202 = sbr.rel (%p200) target = $region36
      $region35: #{conv1d_barnn_forward.1} parent=23 // pred_region
        %s203 = smul.u32 4, %s11
        %p204 = scmp.lt.s32.totalorder %s203, 7
        %s205 = scalar_select %p204, %s203, 7
        %s206 = smul.addr %s205, 8
        %s207 = scalar_lea.vmem %s4, %s206
        %s208 = smul.u32 4, %s11
      $region36: #{conv1d_barnn_forward.1} parent=23 // pred_fallthru
        _
    $region24: #{conv1d_barnn_forward.1} parent=5 // pred_fallthru
      _
    %p209 = scmp.le.s32.totalorder 1, %s11
    %p210 = scmp.lt.s32.totalorder %s11, 3
    %p211 = pnand %p209, %p210
    %p212 = pneg %p211
    // Predicated region
    $region37: #{conv1d_barnn_forward.1} parent=5 // pred_check
      _
    $region38: #{conv1d_barnn_forward.1} parent=5 // pred_check_branch
      %214 = sbr.rel (%p211) target = $region40
    $region39: #{conv1d_barnn_forward.1} parent=5 // pred_region
      %s215 = ssub.s32 %s11, 1
      %s216 = smul.u32 4, %s16
      %p217 = scmp.lt.s32.totalorder %s216, 7
      %s218 = scalar_select %p217, %s216, 7
      %s219 = smul.addr %s218, 2
      %s220 = smul.addr %s219, 4
      %s221 = scalar_lea.vmem %s0, %s220
      %p222 = pneg %p37
      %p223 = pneg %p34
      %p224 = pneg %p58
      %p225 = pneg %p55
      %p226 = pneg %p79
      %p227 = pneg %p76
      %s228 = smul.u32 4, %s16
      %p229 = scmp.lt.s32.totalorder %s228, 7
      %s230 = scalar_select %p229, %s228, 7
      %s231 = scalar_lea.vmem %s3, %s230
      %p232 = pneg %p105
      %p233 = pneg %p102
      %s234 = smul.u32 4, %s16
      %p235 = scmp.lt.s32.totalorder %s234, 7
      %s236 = scalar_select %p235, %s234, 7
      %s237 = smul.addr %s236, 8
      %s238 = scalar_lea.vmem %s4, %s237
      %p239 = pneg %p131
      %p240 = pneg %p128
      %p241 = pneg %p157
      %p242 = pneg %p154
      %s243 = smul.u32 4, %s16
      %p244 = scmp.lt.s32.totalorder %s243, 7
      %s245 = scalar_select %p244, %s243, 7
      %s246 = smul.addr %s245, 8
      %s247 = scalar_lea.vmem %s5, %s246
      %s248 = smul.u32 4, %s16
      %p249 = scmp.lt.s32.totalorder %s248, 7
      %s250 = scalar_select %p249, %s248, 7
      %s251 = smul.addr %s250, 2
      %s252 = smul.addr %s251, 4
      %s253 = scalar_lea.vmem %s0, %s252
      %s254 = smul.u32 4, %s16
      %s255 = smul.u32 4, %s16
      %p256 = scmp.lt.s32.totalorder %s255, 7
      %s257 = scalar_select %p256, %s255, 7
      %s258 = scalar_lea.vmem %s3, %s257
      %s259 = smul.u32 4, %s16
      %s260 = smul.u32 4, %s16
      %p261 = scmp.lt.s32.totalorder %s260, 7
      %s262 = scalar_select %p261, %s260, 7
      %s263 = smul.addr %s262, 8
      %s264 = scalar_lea.vmem %s4, %s263
      %s265 = smul.u32 4, %s16
      %s266 = smul.u32 4, %s16
      %p267 = scmp.lt.s32.totalorder %s266, 7
      %s268 = scalar_select %p267, %s266, 7
      %s269 = smul.addr %s268, 8
      %s270 = scalar_lea.vmem %s5, %s269
      %s271 = smul.u32 4, %s16
      %v272 = vld [vmem:[%s253] sm:$0xf]
      %273 = vst [vmem:[#allocation2] sm:$0xf] %v272
      %v274 = vld [vmem:[%s253] sm:$0xff]
      %s276 = scalar_lea.vmem [#allocation1], 1
      %277 = vst [vmem:[%s276] ss:$2 sm:$0xff] %v274
      %v278 = vld.sshfl [vmem:[#allocation1] sm:$0xff pattern:$0x75316420]
      %v279 = vld.sshfl [vmem:[#allocation1 + $0x8] sm:$0xff pattern:$0x75316420]
      %280 = vrot.lane.b32.xlu0 %v278, 127
      %v281 = vpop.permute.xlu0 %280
      %282 = vrot.lane.b32.xlu0 %v279, 127
      %v283 = vpop.permute.xlu0 %282
      %vm284 = vcmask 1039360
      %v285 = vsel %vm284, %v281, %v283
      %287 = vst [vmem:[#allocation2] sm:$0xf0] %v285
      %v288 = vld [vmem:[%s253] sm:$0xff]
      %290 = vst [vmem:[#allocation1] ss:$2 sm:$0xff] %v288
      %v291 = vld.sshfl [vmem:[#allocation1] sm:$0xff pattern:$0x75316420]
      %v292 = vld.sshfl [vmem:[#allocation1 + $0x8] sm:$0xff pattern:$0x75316420]
      %293 = vrot.lane.b32.xlu0 %v291, 126
      %v294 = vpop.permute.xlu0 %293
      %295 = vrot.lane.b32.xlu0 %v292, 126
      %v296 = vpop.permute.xlu0 %295
      %vm297 = vcmask 1031168
      %v298 = vsel %vm297, %v294, %v296
      %300 = vst [vmem:[#allocation2 + $0x20] sm:$0xf] %v298
      %s301 = scalar_lea.vmem %s253, 8
      %v302 = vld [vmem:[%s301] sm:$0xf]
      %303 = vst [vmem:[#allocation2 + $0x8] sm:$0xf] %v302
      %v304 = vld [vmem:[%s301] sm:$0xff]
      %s306 = scalar_lea.vmem [#allocation1], 1
      %307 = vst [vmem:[%s306] ss:$2 sm:$0xff] %v304
      %v308 = vld.sshfl [vmem:[#allocation1] sm:$0xff pattern:$0x75316420]
      %v309 = vld.sshfl [vmem:[#allocation1 + $0x8] sm:$0xff pattern:$0x75316420]
      %310 = vrot.lane.b32.xlu0 %v308, 127
      %v311 = vpop.permute.xlu0 %310
      %312 = vrot.lane.b32.xlu0 %v309, 127
      %v313 = vpop.permute.xlu0 %312
      %v314 = vsel %vm284, %v311, %v313
      %316 = vst [vmem:[#allocation2 + $0x8] sm:$0xf0] %v314
      %v317 = vld [vmem:[%s301] sm:$0xff]
      %319 = vst [vmem:[#allocation1] ss:$2 sm:$0xff] %v317
      %v320 = vld.sshfl [vmem:[#allocation1] sm:$0xff pattern:$0x75316420]
      %v321 = vld.sshfl [vmem:[#allocation1 + $0x8] sm:$0xff pattern:$0x75316420]
      %322 = vrot.lane.b32.xlu0 %v320, 126
      %v323 = vpop.permute.xlu0 %322
      %324 = vrot.lane.b32.xlu0 %v321, 126
      %v325 = vpop.permute.xlu0 %324
      %v326 = vsel %vm297, %v323, %v325
      %328 = vst [vmem:[#allocation2 + $0x28] sm:$0xf] %v326
      %s329 = scalar_lea.vmem %s253, 16
      %v330 = vld [vmem:[%s329] sm:$0xf]
      %331 = vst [vmem:[#allocation2 + $0x10] sm:$0xf] %v330
      %v332 = vld [vmem:[%s329] sm:$0xff]
      %s334 = scalar_lea.vmem [#allocation1], 1
      %335 = vst [vmem:[%s334] ss:$2 sm:$0xff] %v332
      %v336 = vld.sshfl [vmem:[#allocation1] sm:$0xff pattern:$0x75316420]
      %v337 = vld.sshfl [vmem:[#allocation1 + $0x8] sm:$0xff pattern:$0x75316420]
      %338 = vrot.lane.b32.xlu0 %v336, 127
      %v339 = vpop.permute.xlu0 %338
      %340 = vrot.lane.b32.xlu0 %v337, 127
      %v341 = vpop.permute.xlu0 %340
      %v342 = vsel %vm284, %v339, %v341
      %344 = vst [vmem:[#allocation2 + $0x10] sm:$0xf0] %v342
      %v345 = vld [vmem:[%s329] sm:$0xff]
      %347 = vst [vmem:[#allocation1] ss:$2 sm:$0xff] %v345
      %v348 = vld.sshfl [vmem:[#allocation1] sm:$0xff pattern:$0x75316420]
      %v349 = vld.sshfl [vmem:[#allocation1 + $0x8] sm:$0xff pattern:$0x75316420]
      %350 = vrot.lane.b32.xlu0 %v348, 126
      %v351 = vpop.permute.xlu0 %350
      %352 = vrot.lane.b32.xlu0 %v349, 126
      %v353 = vpop.permute.xlu0 %352
      %v354 = vsel %vm297, %v351, %v353
      %356 = vst [vmem:[#allocation2 + $0x30] sm:$0xf] %v354
      %s357 = scalar_lea.vmem %s253, 24
      %v358 = vld [vmem:[%s357] sm:$0xf]
      %359 = vst [vmem:[#allocation2 + $0x18] sm:$0xf] %v358
      %v360 = vld [vmem:[%s357] sm:$0xff]
      %s362 = scalar_lea.vmem [#allocation1], 1
      %363 = vst [vmem:[%s362] ss:$2 sm:$0xff] %v360
      %v364 = vld.sshfl [vmem:[#allocation1] sm:$0xff pattern:$0x75316420]
      %v365 = vld.sshfl [vmem:[#allocation1 + $0x8] sm:$0xff pattern:$0x75316420]
      %366 = vrot.lane.b32.xlu0 %v364, 127
      %v367 = vpop.permute.xlu0 %366
      %368 = vrot.lane.b32.xlu0 %v365, 127
      %v369 = vpop.permute.xlu0 %368
      %v370 = vsel %vm284, %v367, %v369
      %372 = vst [vmem:[#allocation2 + $0x18] sm:$0xf0] %v370
      %v373 = vld [vmem:[%s357] sm:$0xff]
      %375 = vst [vmem:[#allocation1] ss:$2 sm:$0xff] %v373
      %v376 = vld.sshfl [vmem:[#allocation1] sm:$0xff pattern:$0x75316420]
      %v377 = vld.sshfl [vmem:[#allocation1 + $0x8] sm:$0xff pattern:$0x75316420]
      %378 = vrot.lane.b32.xlu0 %v376, 126
      %v379 = vpop.permute.xlu0 %378
      %380 = vrot.lane.b32.xlu0 %v377, 126
      %v381 = vpop.permute.xlu0 %380
      %v382 = vsel %vm297, %v379, %v381
      %384 = vst [vmem:[#allocation2 + $0x38] sm:$0xf] %v382
      %v385 = vld [vmem:[#allocation2] sm:$0xff]
      %v386 = vld [vmem:[#allocation2 + $0x8] sm:$0xff]
      %v387 = vld [vmem:[#allocation2 + $0x10] sm:$0xff]
      %v388 = vld [vmem:[#allocation2 + $0x18] sm:$0xff]
      %v389 = vld [vmem:[#allocation2 + $0x20] sm:$0xf]
      %v390 = vld [vmem:[#allocation2 + $0x28] sm:$0xf]
      %v391 = vld [vmem:[#allocation2 + $0x30] sm:$0xf]
      %v392 = vld [vmem:[#allocation2 + $0x38] sm:$0xf]
      %v393 = vld [vmem:[%s1] sm:$0xff]
      %vm394 = vcmask 97280
      %v396 = vsel %vm394, %v393, 0
      %vm398 = vcmask 1043456
      %v400 = vsel %vm398, %v389, 0
      %v403 = vsel %vm398, %v390, 0
      %v406 = vsel %vm398, %v391, 0
      %v409 = vsel %vm398, %v392, 0
      %411 = vmatpush.msra.mxu0 0.0
      %412 = vmatpush.msra.mxu0 0.0
      %413 = vmatpush.msra.mxu0 0.0
      %414 = vmatpush.msra.mxu0 0.0
      %415 = vmatpush.msra.mxu0 0.0
      %416 = vmatpush.msra.mxu0 0.0
      %417 = vmatpush.msra.mxu0 0.0
      %418 = vmatpush.msra.mxu0 0.0
      %419 = vmatpush.msra.mxu0 0.0
      %420 = vmatpush.msra.mxu0 0.0
      %421 = vmatpush.msra.mxu0 0.0
      %422 = vmatpush.msra.mxu0 0.0
      %423 = vmatpush.msra.mxu0 0.0
      %424 = vmatpush.msra.mxu0 0.0
      %425 = vmatpush.msra.mxu0 %v400
      %426 = vmatpush.msra.mxu0 %v385
      %427 = vmatmul.f32.gmra.mxu0 %v396
      %v428 = vpop.f32.mrf.mxu0
      %v429 = vadd.f32 0.0, %v428
      %430 = vdwg.mxu0
      %431 = vmatpush.msra.mxu0 0.0
      %432 = vmatpush.msra.mxu0 0.0
      %433 = vmatpush.msra.mxu0 0.0
      %434 = vmatpush.msra.mxu0 0.0
      %435 = vmatpush.msra.mxu0 0.0
      %436 = vmatpush.msra.mxu0 0.0
      %437 = vmatpush.msra.mxu0 0.0
      %438 = vmatpush.msra.mxu0 0.0
      %439 = vmatpush.msra.mxu0 0.0
      %440 = vmatpush.msra.mxu0 0.0
      %441 = vmatpush.msra.mxu0 0.0
      %442 = vmatpush.msra.mxu0 0.0
      %443 = vmatpush.msra.mxu0 0.0
      %444 = vmatpush.msra.mxu0 0.0
      %445 = vmatpush.msra.mxu0 %v403
      %446 = vmatpush.msra.mxu0 %v386
      %447 = vmatmul.f32.gmra.mxu0 %v396
      %v448 = vpop.f32.mrf.mxu0
      %v449 = vadd.f32 0.0, %v448
      %450 = vdwg.mxu0
      %451 = vmatpush.msra.mxu0 0.0
      %452 = vmatpush.msra.mxu0 0.0
      %453 = vmatpush.msra.mxu0 0.0
      %454 = vmatpush.msra.mxu0 0.0
      %455 = vmatpush.msra.mxu0 0.0
      %456 = vmatpush.msra.mxu0 0.0
      %457 = vmatpush.msra.mxu0 0.0
      %458 = vmatpush.msra.mxu0 0.0
      %459 = vmatpush.msra.mxu0 0.0
      %460 = vmatpush.msra.mxu0 0.0
      %461 = vmatpush.msra.mxu0 0.0
      %462 = vmatpush.msra.mxu0 0.0
      %463 = vmatpush.msra.mxu0 0.0
      %464 = vmatpush.msra.mxu0 0.0
      %465 = vmatpush.msra.mxu0 %v406
      %466 = vmatpush.msra.mxu0 %v387
      %467 = vmatmul.f32.gmra.mxu0 %v396
      %v468 = vpop.f32.mrf.mxu0
      %v469 = vadd.f32 0.0, %v468
      %470 = vdwg.mxu0
      %471 = vmatpush.msra.mxu0 0.0
      %472 = vmatpush.msra.mxu0 0.0
      %473 = vmatpush.msra.mxu0 0.0
      %474 = vmatpush.msra.mxu0 0.0
      %475 = vmatpush.msra.mxu0 0.0
      %476 = vmatpush.msra.mxu0 0.0
      %477 = vmatpush.msra.mxu0 0.0
      %478 = vmatpush.msra.mxu0 0.0
      %479 = vmatpush.msra.mxu0 0.0
      %480 = vmatpush.msra.mxu0 0.0
      %481 = vmatpush.msra.mxu0 0.0
      %482 = vmatpush.msra.mxu0 0.0
      %483 = vmatpush.msra.mxu0 0.0
      %484 = vmatpush.msra.mxu0 0.0
      %485 = vmatpush.msra.mxu0 %v409
      %486 = vmatpush.msra.mxu0 %v388
      %487 = vmatmul.f32.gmra.mxu0 %v396
      %v488 = vpop.f32.mrf.mxu0
      %v489 = vadd.f32 0.0, %v488
      %490 = vdwg.mxu0
      %v491 = vld [vmem:[%s2] sm:$0xff]
      %v492 = vmul.f32 %v385, %v385
      %v493 = vmul.f32 %v386, %v386
      %v494 = vmul.f32 %v387, %v387
      %v495 = vmul.f32 %v388, %v388
      %v496 = vmul.f32 %v389, %v389
      %v497 = vmul.f32 %v390, %v390
      %v498 = vmul.f32 %v391, %v391
      %v499 = vmul.f32 %v392, %v392
      %v501 = vsel %vm394, %v491, 0
      %v504 = vsel %vm398, %v496, 0
      %v507 = vsel %vm398, %v497, 0
      %v510 = vsel %vm398, %v498, 0
      %v513 = vsel %vm398, %v499, 0
      %515 = vmatpush.msra.mxu0 0.0
      %516 = vmatpush.msra.mxu0 0.0
      %517 = vmatpush.msra.mxu0 0.0
      %518 = vmatpush.msra.mxu0 0.0
      %519 = vmatpush.msra.mxu0 0.0
      %520 = vmatpush.msra.mxu0 0.0
      %521 = vmatpush.msra.mxu0 0.0
      %522 = vmatpush.msra.mxu0 0.0
      %523 = vmatpush.msra.mxu0 0.0
      %524 = vmatpush.msra.mxu0 0.0
      %525 = vmatpush.msra.mxu0 0.0
      %526 = vmatpush.msra.mxu0 0.0
      %527 = vmatpush.msra.mxu0 0.0
      %528 = vmatpush.msra.mxu0 0.0
      %529 = vmatpush.msra.mxu0 %v504
      %530 = vmatpush.msra.mxu0 %v492
      %531 = vmatmul.f32.gmra.mxu0 %v501
      %v532 = vpop.f32.mrf.mxu0
      %v533 = vadd.f32 0.0, %v532
      %534 = vdwg.mxu0
      %535 = vmatpush.msra.mxu0 0.0
      %536 = vmatpush.msra.mxu0 0.0
      %537 = vmatpush.msra.mxu0 0.0
      %538 = vmatpush.msra.mxu0 0.0
      %539 = vmatpush.msra.mxu0 0.0
      %540 = vmatpush.msra.mxu0 0.0
      %541 = vmatpush.msra.mxu0 0.0
      %542 = vmatpush.msra.mxu0 0.0
      %543 = vmatpush.msra.mxu0 0.0
      %544 = vmatpush.msra.mxu0 0.0
      %545 = vmatpush.msra.mxu0 0.0
      %546 = vmatpush.msra.mxu0 0.0
      %547 = vmatpush.msra.mxu0 0.0
      %548 = vmatpush.msra.mxu0 0.0
      %549 = vmatpush.msra.mxu0 %v507
      %550 = vmatpush.msra.mxu0 %v493
      %551 = vmatmul.f32.gmra.mxu0 %v501
      %v552 = vpop.f32.mrf.mxu0
      %v553 = vadd.f32 0.0, %v552
      %554 = vdwg.mxu0
      %555 = vmatpush.msra.mxu0 0.0
      %556 = vmatpush.msra.mxu0 0.0
      %557 = vmatpush.msra.mxu0 0.0
      %558 = vmatpush.msra.mxu0 0.0
      %559 = vmatpush.msra.mxu0 0.0
      %560 = vmatpush.msra.mxu0 0.0
      %561 = vmatpush.msra.mxu0 0.0
      %562 = vmatpush.msra.mxu0 0.0
      %563 = vmatpush.msra.mxu0 0.0
      %564 = vmatpush.msra.mxu0 0.0
      %565 = vmatpush.msra.mxu0 0.0
      %566 = vmatpush.msra.mxu0 0.0
      %567 = vmatpush.msra.mxu0 0.0
      %568 = vmatpush.msra.mxu0 0.0
      %569 = vmatpush.msra.mxu0 %v510
      %570 = vmatpush.msra.mxu0 %v494
      %571 = vmatmul.f32.gmra.mxu0 %v501
      %v572 = vpop.f32.mrf.mxu0
      %v573 = vadd.f32 0.0, %v572
      %574 = vdwg.mxu0
      %575 = vmatpush.msra.mxu0 0.0
      %576 = vmatpush.msra.mxu0 0.0
      %577 = vmatpush.msra.mxu0 0.0
      %578 = vmatpush.msra.mxu0 0.0
      %579 = vmatpush.msra.mxu0 0.0
      %580 = vmatpush.msra.mxu0 0.0
      %581 = vmatpush.msra.mxu0 0.0
      %582 = vmatpush.msra.mxu0 0.0
      %583 = vmatpush.msra.mxu0 0.0
      %584 = vmatpush.msra.mxu0 0.0
      %585 = vmatpush.msra.mxu0 0.0
      %586 = vmatpush.msra.mxu0 0.0
      %587 = vmatpush.msra.mxu0 0.0
      %588 = vmatpush.msra.mxu0 0.0
      %589 = vmatpush.msra.mxu0 %v513
      %590 = vmatpush.msra.mxu0 %v495
      %591 = vmatmul.f32.gmra.mxu0 %v501
      %v592 = vpop.f32.mrf.mxu0
      %v593 = vadd.f32 0.0, %v592
      %594 = vdwg.mxu0
      %v595 = vld [vmem:[%s258] sm:$0x1]
      %v596 = vld [vmem:[%s264] sm:$0xff]
      %v598 = vperm.slane %v595, 0
      %599 = vset.pattern.permute.xlu0 0
      %600 = vperm.xlu0 %599, %v598
      %v601 = vpop.permute.xlu0 %600
      %v603 = vmul.f32 %v601, %v429
      %v604 = vmul.f32 %v595, %v595
      %v606 = vperm.slane %v604, 0
      %607 = vset.pattern.permute.xlu0 0
      %608 = vperm.xlu0 %607, %v606
      %v609 = vpop.permute.xlu0 %608
      %v611 = vmul.f32 %v609, %v533
      %v612 = vadd.f32 %v611, 1e-18
      %v613 = vrsqrt.pop %v612
      %v614 = vmul.f32 %v613, %v612
      %v615 = vmul.f32 %v614, %v613
      %v616 = vmul.f32 0.5, %v615
      %v617 = vsub.f32 1.5, %v616
      %v618 = vmul.f32 %v613, %v617
      %v619 = vmul.f32 %v612, %v618
      %vm620 = vcmp.eq.f32.partialorder %v612, inf
      %v621 = vsel %vm620, %v612, %v619
      %vm622 = vcmp.eq.f32.partialorder %v612, 0.0
      %v623 = vand.u32 %v612, 2147483648
      %v624 = vsel %vm622, %v623, %v621
      %v625 = vmul.f32 %v624, %v596
      %v626 = vadd.f32 %v603, %v625
      %627 = vst [vmem:[%s270] sm:$0xff] %v626
      %s628 = scalar_lea.vmem %s258, 1
      %v629 = vld [vmem:[%s628] sm:$0x1]
      %s630 = scalar_lea.vmem %s264, 8
      %v631 = vld [vmem:[%s630] sm:$0xff]
      %v633 = vperm.slane %v629, 0
      %634 = vset.pattern.permute.xlu0 0
      %635 = vperm.xlu0 %634, %v633
      %v636 = vpop.permute.xlu0 %635
      %v638 = vmul.f32 %v636, %v449
      %v639 = vmul.f32 %v629, %v629
      %v641 = vperm.slane %v639, 0
      %642 = vset.pattern.permute.xlu0 0
      %643 = vperm.xlu0 %642, %v641
      %v644 = vpop.permute.xlu0 %643
      %v646 = vmul.f32 %v644, %v553
      %v647 = vadd.f32 %v646, 1e-18
      %v648 = vrsqrt.pop %v647
      %v649 = vmul.f32 %v648, %v647
      %v650 = vmul.f32 %v649, %v648
      %v651 = vmul.f32 0.5, %v650
      %v652 = vsub.f32 1.5, %v651
      %v653 = vmul.f32 %v648, %v652
      %v654 = vmul.f32 %v647, %v653
      %vm655 = vcmp.eq.f32.partialorder %v647, inf
      %v656 = vsel %vm655, %v647, %v654
      %vm657 = vcmp.eq.f32.partialorder %v647, 0.0
      %v658 = vand.u32 %v647, 2147483648
      %v659 = vsel %vm657, %v658, %v656
      %v660 = vmul.f32 %v659, %v631
      %v661 = vadd.f32 %v638, %v660
      %s662 = scalar_lea.vmem %s270, 8
      %663 = vst [vmem:[%s662] sm:$0xff] %v661
      %s664 = scalar_lea.vmem %s258, 2
      %v665 = vld [vmem:[%s664] sm:$0x1]
      %s666 = scalar_lea.vmem %s264, 16
      %v667 = vld [vmem:[%s666] sm:$0xff]
      %v669 = vperm.slane %v665, 0
      %670 = vset.pattern.permute.xlu0 0
      %671 = vperm.xlu0 %670, %v669
      %v672 = vpop.permute.xlu0 %671
      %v674 = vmul.f32 %v672, %v469
      %v675 = vmul.f32 %v665, %v665
      %v677 = vperm.slane %v675, 0
      %678 = vset.pattern.permute.xlu0 0
      %679 = vperm.xlu0 %678, %v677
      %v680 = vpop.permute.xlu0 %679
      %v682 = vmul.f32 %v680, %v573
      %v683 = vadd.f32 %v682, 1e-18
      %v684 = vrsqrt.pop %v683
      %v685 = vmul.f32 %v684, %v683
      %v686 = vmul.f32 %v685, %v684
      %v687 = vmul.f32 0.5, %v686
      %v688 = vsub.f32 1.5, %v687
      %v689 = vmul.f32 %v684, %v688
      %v690 = vmul.f32 %v683, %v689
      %vm691 = vcmp.eq.f32.partialorder %v683, inf
      %v692 = vsel %vm691, %v683, %v690
      %vm693 = vcmp.eq.f32.partialorder %v683, 0.0
      %v694 = vand.u32 %v683, 2147483648
      %v695 = vsel %vm693, %v694, %v692
      %v696 = vmul.f32 %v695, %v667
      %v697 = vadd.f32 %v674, %v696
      %s698 = scalar_lea.vmem %s270, 16
      %699 = vst [vmem:[%s698] sm:$0xff] %v697
      %s700 = scalar_lea.vmem %s258, 3
      %v701 = vld [vmem:[%s700] sm:$0x1]
      %s702 = scalar_lea.vmem %s264, 24
      %v703 = vld [vmem:[%s702] sm:$0xff]
      %v705 = vperm.slane %v701, 0
      %706 = vset.pattern.permute.xlu0 0
      %707 = vperm.xlu0 %706, %v705
      %v708 = vpop.permute.xlu0 %707
      %v710 = vmul.f32 %v708, %v489
      %v711 = vmul.f32 %v701, %v701
      %v713 = vperm.slane %v711, 0
      %714 = vset.pattern.permute.xlu0 0
      %715 = vperm.xlu0 %714, %v713
      %v716 = vpop.permute.xlu0 %715
      %v718 = vmul.f32 %v716, %v593
      %v719 = vadd.f32 %v718, 1e-18
      %v720 = vrsqrt.pop %v719
      %v721 = vmul.f32 %v720, %v719
      %v722 = vmul.f32 %v721, %v720
      %v723 = vmul.f32 0.5, %v722
      %v724 = vsub.f32 1.5, %v723
      %v725 = vmul.f32 %v720, %v724
      %v726 = vmul.f32 %v719, %v725
      %vm727 = vcmp.eq.f32.partialorder %v719, inf
      %v728 = vsel %vm727, %v719, %v726
      %vm729 = vcmp.eq.f32.partialorder %v719, 0.0
      %v730 = vand.u32 %v719, 2147483648
      %v731 = vsel %vm729, %v730, %v728
      %v732 = vmul.f32 %v731, %v703
      %v733 = vadd.f32 %v710, %v732
      %s734 = scalar_lea.vmem %s270, 24
      %735 = vst [vmem:[%s734] sm:$0xff] %v733
      %s736 = smul.u32 4, %s16
      %p737 = scmp.lt.s32.totalorder %s736, 7
      %s738 = scalar_select %p737, %s736, 7
      %s739 = smul.addr %s738, 8
      %s740 = scalar_lea.vmem %s5, %s739
      // Predicated region
      $region41: #{conv1d_barnn_forward.1} parent=39 // pred_check
        %p741 = pneg %p154
      $region42: #{conv1d_barnn_forward.1} parent=39 // pred_check_branch
        %743 = sbr.rel (%p741) target = $region44
      $region43: #{conv1d_barnn_forward.1} parent=39 // pred_region
        %s744 = smul.u32 4, %s16
      $region44: #{conv1d_barnn_forward.1} parent=39 // pred_fallthru
        _
    $region40: #{conv1d_barnn_forward.1} parent=5 // pred_fallthru
      _
    %p745 = scmp.le.s32.totalorder 2, %s11
    // Predicated region
    $region45: #{conv1d_barnn_forward.1} parent=5 // pred_check
      %p746 = pneg %p745
    $region46: #{conv1d_barnn_forward.1} parent=5 // pred_check_branch
      %748 = sbr.rel (%p746) target = $region48
    $region47: #{conv1d_barnn_forward.1} parent=5 // pred_region
      %s749 = ssub.s32 %s11, 2
      // Predicated region
      $region49: #{conv1d_barnn_forward.1} parent=47 // pred_check
        %p750 = pneg %p160
      $region50: #{conv1d_barnn_forward.1} parent=47 // pred_check_branch
        %752 = sbr.rel (%p750) target = $region52
      $region51: #{conv1d_barnn_forward.1} parent=47 // pred_region
        %s753 = smul.u32 4, %s17
        %p754 = scmp.lt.s32.totalorder %s753, 7
        %s755 = scalar_select %p754, %s753, 7
        %s756 = smul.addr %s755, 8
        %s757 = scalar_lea.vmem %s5, %s756
      $region52: #{conv1d_barnn_forward.1} parent=47 // pred_fallthru
        _
    $region48: #{conv1d_barnn_forward.1} parent=5 // pred_fallthru
      _
  $region6: #{conv1d_barnn_forward.1} parent=0 // loop_footer
    %s15 = sadd.s32 1, %s11
  $region7: #{conv1d_barnn_forward.1} parent=0 // loop_footer_branch
    %10 = sbr.rel target = $region3
  $region8: #{conv1d_barnn_forward.1} parent=0 // loop_exit
    _

</llo_original>
